<compile_context>
chip_gen: v6e
topology: v6e:2x2x1
jax: 0.10.0
libtpu: 0.0.40
codegen_flags: <defaults>
</compile_context>

<pallas_src>
import jax
import jax.numpy as jnp
from jax.experimental import pallas as pl
from jax.experimental.pallas import tpu as pltpu


# ----------------------------------------------------------------------------
# Module configuration (fixed synthetic instantiation of Conv1dExtractor)
# ----------------------------------------------------------------------------
CONV_PARAMS = [
    dict(in_channels=4, out_channels=8, kernel_size=3, padding=1),
    dict(in_channels=8, out_channels=8, kernel_size=3, padding=1),
]
OUTPUT_DIM = [128, 32, 32]      # 128 == 8 channels * 16 length after the convs
SHARE_PARAMS = False
ADD_BN = False                  # no BatchNorm1d layers in this config

OUT_PAD = 128                   # fc2 output padded to a full lane width
                                # (policy latent in [:, :32], value in [:, 32:64])


# ----------------------------------------------------------------------------
# The single fused Pallas kernel: 4 matmuls + bias adds + activations, zero
# in-kernel layout ops.
# ----------------------------------------------------------------------------
def _fused_extractor_kernel(x_ref, wc1_ref, bc1_ref, wc2_ref, bc2_ref,
                            wf1_ref, bf1_ref, wf2_ref, bf2_ref, out_ref):
    """Whole Conv1dExtractor forward (policy + value branches).

      x_ref   : (B, C_in*L)       flattened input (row-major collapse of NCL)
      wc1_ref : (C_in*L, 2*C1*L)  conv1 as dense Toeplitz, branches stacked on cols
      bc1_ref : (1, 2*C1*L)
      wc2_ref : (2*C1*L, 2*C2*L)  conv2 dense Toeplitz, block-diagonal over branches
      bc2_ref : (1, 2*C2*L)
      wf1_ref : (2*D0, 2*D1)      fc1, block-diagonal, pre-transposed
      bf1_ref : (1, 2*D1)
      wf2_ref : (2*D1, OUT_PAD)   fc2, block-diagonal, pre-transposed, lane-padded
      bf2_ref : (1, OUT_PAD)
      out_ref : (B, OUT_PAD)      [:, :D2] policy latent, [:, D2:2*D2] value latent
    """
    f32 = jnp.float32

    def elu(v):
        # torch.nn.ELU(alpha=1): x>0 -> x, else expm1(x).
        # Single transcendental: exp(min(v,0)) - 1 (abs err <= ~1.2e-7 vs expm1).
        return jnp.where(v > 0.0, v, jnp.exp(jnp.minimum(v, 0.0)) - 1.0)

    y1 = elu(jnp.dot(x_ref[...], wc1_ref[...],
                     preferred_element_type=f32) + bc1_ref[...])   # (B, 2*C1*L)
    y2 = elu(jnp.dot(y1, wc2_ref[...],
                     preferred_element_type=f32) + bc2_ref[...])   # (B, 2*C2*L) == flat
    h1 = jnp.tanh(jnp.dot(y2, wf1_ref[...],
                          preferred_element_type=f32) + bf1_ref[...])  # (B, 2*D1)
    out_ref[...] = jnp.tanh(jnp.dot(h1, wf2_ref[...],
                                    preferred_element_type=f32) + bf2_ref[...])


# ----------------------------------------------------------------------------
# Wrappers
# ----------------------------------------------------------------------------
def _fused_forward(features, packed):
    B, C_in, L = features.shape
    for lp in CONV_PARAMS:
        # length-preserving stride-1 'same' convs (design assumption of the packing)
        assert 2 * lp["padding"] == lp["kernel_size"] - 1 and lp.get("stride", 1) == 1
    assert C_in == CONV_PARAMS[0]["in_channels"]
    assert OUTPUT_DIM[0] == CONV_PARAMS[-1]["out_channels"] * L
    assert packed["wc1"].shape[0] == C_in * L

    # (B, C_in, L) -> (B, C_in*L) is a contiguous row-major collapse: pure layout
    # plumbing done in the wrapper so the kernel starts with the first matmul.
    x_flat = features.reshape(B, C_in * L).astype(jnp.float32)

    vmem = pltpu.MemorySpace.VMEM
    # Gridless single program; total operand footprint ~0.4 MiB, all in VMEM.
    # For large B: add a batch-tile grid axis (dimension_semantics=("parallel",))
    # to shard across v7x's two TensorCores -- pure overhead at B=2.
    return pl.pallas_call(
        _fused_extractor_kernel,
        out_shape=jax.ShapeDtypeStruct((B, OUT_PAD), jnp.float32),
        in_specs=[pl.BlockSpec(memory_space=vmem)] * 9,
        out_specs=pl.BlockSpec(memory_space=vmem),
    )(x_flat, packed["wc1"], packed["bc1"], packed["wc2"], packed["bc2"],
      packed["wf1"], packed["bf1"], packed["wf2"], packed["bf2"])


def conv1d_extractor_forward(features, packed):
    """Returns (latent_policy, latent_value); value is None when sharing params."""
    out = _fused_forward(features, packed)
    D2 = OUTPUT_DIM[-1]
    policy = out[:, :D2]
    value = None if SHARE_PARAMS else out[:, D2:2 * D2]
    return policy, value


# ----------------------------------------------------------------------------
# Parameters: raw PyTorch-layout init + one-time packing into kernel layout
# ----------------------------------------------------------------------------
def _uniform(key, shape, fan_in):
    bound = 1.0 / jnp.sqrt(jnp.float32(fan_in))
    return jax.random.uniform(key, shape, jnp.float32, -bound, bound)


def init_params(key):
    """Deterministic init with PyTorch-layout tensors (uniform fan-in bounds)."""
    params = {}
    for branch in (("policy",) if SHARE_PARAMS else ("policy", "value")):
        convs, linears = [], []
        for lp in CONV_PARAMS:
            key, kw, kb = jax.random.split(key, 3)
            fan_in = lp["in_channels"] * lp["kernel_size"]
            w = _uniform(kw, (lp["out_channels"], lp["in_channels"],
                              lp["kernel_size"]), fan_in)
            b = _uniform(kb, (lp["out_channels"],), fan_in)
            convs.append((w, b, lp["padding"]))
        for i in range(1, len(OUTPUT_DIM)):
            key, kw, kb = jax.random.split(key, 3)
            d_in, d_out = OUTPUT_DIM[i - 1], OUTPUT_DIM[i]
            w = _uniform(kw, (d_out, d_in), d_in)
            b = _uniform(kb, (d_out,), d_in)
            linears.append((w, b))
        params[branch] = dict(convs=convs, linears=linears)
    return params


def _conv_to_dense(w, L, pad):
    """(C_out, C_in, K) 'same'-conv weight -> dense (C_in*L, C_out*L) matrix.

    Row index = c*L + l_in (flattened input), column index = o*L + l_out
    (flattened output, == PyTorch flatten(start_dim=1) order).  Boundary
    zero-padding is baked in, so no in-kernel shifting or masking is needed."""
    C_out, C_in, K = w.shape
    l_in = jnp.arange(L)[:, None]
    l_out = jnp.arange(L)[None, :]
    k = l_in - l_out + pad                                   # tap index, (L, L)
    valid = (k >= 0) & (k < K)
    taps = w[:, :, jnp.clip(k, 0, K - 1)]                    # (C_out, C_in, L, L)
    taps = jnp.where(valid[None, None], taps, 0.0)
    # (C_out, C_in, l_in, l_out) -> (C_in, l_in, C_out, l_out) -> 2-D
    return taps.transpose(1, 2, 0, 3).reshape(C_in * L, C_out * L)


def pack_params(raw):
    """One-time (init-side) repacking of PyTorch-layout weights into the fused
    kernel layout: convs as dense Toeplitz matrices over the flattened feature
    axis, branches stacked / block-diagonal, linears pre-transposed, fc2
    zero-padded to a full 128-lane output."""
    pol = raw["policy"]
    val = raw["policy"] if SHARE_PARAMS else raw["value"]
    C_in = CONV_PARAMS[0]["in_channels"]
    C1 = CONV_PARAMS[0]["out_channels"]
    C2 = CONV_PARAMS[1]["out_channels"]
    D0, D1, D2 = OUTPUT_DIM
    L = D0 // C2                                  # conv length implied by the config
    pad1 = CONV_PARAMS[0]["padding"]
    pad2 = CONV_PARAMS[1]["padding"]

    def rep_bias(b):                              # per-channel bias -> per flat column
        return jnp.repeat(b, L)

    # conv1: both branches read the same input -> stacked on output columns
    wc1 = jnp.concatenate([_conv_to_dense(pol["convs"][0][0], L, pad1),
                           _conv_to_dense(val["convs"][0][0], L, pad1)],
                          axis=1)                                            # (C_in*L, 2*C1*L)
    bc1 = jnp.concatenate([rep_bias(pol["convs"][0][1]),
                           rep_bias(val["convs"][0][1])])[None, :]           # (1, 2*C1*L)

    # conv2: block-diagonal so each branch only reads its own activations
    wc2 = jnp.zeros((2 * C1 * L, 2 * C2 * L), jnp.float32)
    wc2 = wc2.at[:C1 * L, :C2 * L].set(_conv_to_dense(pol["convs"][1][0], L, pad2))
    wc2 = wc2.at[C1 * L:, C2 * L:].set(_conv_to_dense(val["convs"][1][0], L, pad2))
    bc2 = jnp.concatenate([rep_bias(pol["convs"][1][1]),
                           rep_bias(val["convs"][1][1])])[None, :]           # (1, 2*C2*L)

    # fc1: block-diagonal, pre-transposed (x @ W.T  ->  x @ Wt); rows match the
    # flattened conv2 output order, so no in-kernel flatten is needed.
    wf1 = jnp.zeros((2 * D0, 2 * D1), jnp.float32)
    wf1 = wf1.at[:D0, :D1].set(pol["linears"][0][0].T)
    wf1 = wf1.at[D0:, D1:].set(val["linears"][0][0].T)
    bf1 = jnp.concatenate([pol["linears"][0][1], val["linears"][0][1]])[None, :]

    # fc2: block-diagonal, pre-transposed, zero-padded to a full 128-lane output
    wf2 = jnp.zeros((2 * D1, OUT_PAD), jnp.float32)
    wf2 = wf2.at[:D1, :D2].set(pol["linears"][1][0].T)
    wf2 = wf2.at[D1:, D2:2 * D2].set(val["linears"][1][0].T)
    bf2 = jnp.zeros((1, OUT_PAD), jnp.float32)
    bf2 = bf2.at[0, :D2].set(pol["linears"][1][1])
    bf2 = bf2.at[0, D2:2 * D2].set(val["linears"][1][1])

    return dict(wc1=wc1, bc1=bc1, wc2=wc2, bc2=bc2,
                wf1=wf1, bf1=bf1, wf2=wf2, bf2=bf2)


# ----------------------------------------------------------------------------
# Pure-JAX reference (for validation only; not Pallas).  precision=HIGHEST so
# the reference matmuls are full-f32 like the kernel's.
# ----------------------------------------------------------------------------
def _reference_forward(features, raw):
    hi = jax.lax.Precision.HIGHEST

    def conv1d(x, w, b, pad):
        Bx, _, Lx = x.shape
        O, _, Kx = w.shape
        xp = jnp.pad(x, ((0, 0), (0, 0), (pad, pad)))
        L_out = Lx + 2 * pad - Kx + 1
        out = jnp.zeros((Bx, O, L_out), jnp.float32)
        for k in range(Kx):
            out = out + jnp.einsum("oc,bcl->bol", w[:, :, k],
                                   xp[:, :, k:k + L_out], precision=hi)
        return out + b[None, :, None]

    def branch(p):
        x = features
        for (w, b, pad) in p["convs"]:
            x = conv1d(x, w, b, pad)
            x = jnp.where(x > 0, x, jnp.expm1(x))          # ELU, alpha=1
        x = x.reshape(x.shape[0], -1)                      # flatten(start_dim=1)
        for (w, b) in p["linears"]:
            x = jnp.tanh(jnp.dot(x, w.T, precision=hi) + b)
        return x

    pol = branch(raw["policy"])
    val = None if SHARE_PARAMS else branch(raw["value"])
    return pol, val


# ----------------------------------------------------------------------------
if __name__ == "__main__":
    key = jax.random.PRNGKey(0)
    key, kx = jax.random.split(key)
    B, C_IN, L = 2, 4, 16
    features = jax.random.normal(kx, (B, C_IN, L), jnp.float32)   # NCL layout

    raw_params = init_params(key)
    packed = pack_params(raw_params)          # one-time init-side weight packing

    fwd = jax.jit(conv1d_extractor_forward)
    policy_out, value_out = fwd(features, packed)
    jax.block_until_ready(policy_out)
    if value_out is not None:
        jax.block_until_ready(value_out)

    assert policy_out.shape == (B, OUTPUT_DIM[-1])
    if not SHARE_PARAMS:
        assert value_out.shape == (B, OUTPUT_DIM[-1])

    # Tight numerical check vs. the pure-JAX reference: all-f32 kernel with f32
    # MXU accumulation.  Any packing/layout bug shows as O(1) errors; the only
    # legitimate differences are accumulation order, MXU f32 pass-mode, and the
    # exp(x)-1 vs expm1 ELU identity (all ~1e-6 .. 1e-5).
    ref_pol, ref_val = _reference_forward(features, raw_params)
    assert bool(jnp.allclose(policy_out, ref_pol, atol=5e-5, rtol=5e-5)), \
        "policy latent mismatch vs reference"
    if not SHARE_PARAMS:
        assert bool(jnp.allclose(value_out, ref_val, atol=5e-5, rtol=5e-5)), \
            "value latent mismatch vs reference"

    print("KERNEL_OK")
</pallas_src>

<mosaic_0001>
module attributes {stable_mosaic.version = 11 : i64} {
  func.func @_fused_extractor_kernel(%arg0: memref<2x64xf32, #tpu.memory_space<vmem>>, %arg1: memref<64x256xf32, #tpu.memory_space<vmem>>, %arg2: memref<1x256xf32, #tpu.memory_space<vmem>>, %arg3: memref<256x256xf32, #tpu.memory_space<vmem>>, %arg4: memref<1x256xf32, #tpu.memory_space<vmem>>, %arg5: memref<256x64xf32, #tpu.memory_space<vmem>>, %arg6: memref<1x64xf32, #tpu.memory_space<vmem>>, %arg7: memref<64x128xf32, #tpu.memory_space<vmem>>, %arg8: memref<1x128xf32, #tpu.memory_space<vmem>>, %arg9: memref<2x128xf32, #tpu.memory_space<vmem>>) attributes {dimension_semantics = [], scalar_prefetch = 0 : i64, scratch_operands = 0 : i64, tpu.core_type = #tpu.core_type<tc>} {
    %c0 = arith.constant 0 : index
    %c0_0 = arith.constant 0 : index
    %0 = vector.load %arg0[%c0, %c0_0] : memref<2x64xf32, #tpu.memory_space<vmem>>, vector<2x64xf32>
    %c0_1 = arith.constant 0 : index
    %c0_2 = arith.constant 0 : index
    %1 = vector.load %arg1[%c0_1, %c0_2] : memref<64x256xf32, #tpu.memory_space<vmem>>, vector<64x256xf32>
    %cst = arith.constant dense<0.000000e+00> : vector<2x256xf32>
    %2 = tpu.matmul %0, %1, %cst {dimension_numbers = #tpu.dot_dimension_numbers<[1], [0], [0], [1], [0, 0, 1, 1], [], []>} : vector<2x64xf32>, vector<64x256xf32>, vector<2x256xf32> -> vector<2x256xf32>
    %c0_3 = arith.constant 0 : index
    %c0_4 = arith.constant 0 : index
    %3 = vector.load %arg2[%c0_3, %c0_4] : memref<1x256xf32, #tpu.memory_space<vmem>>, vector<1x256xf32>
    %4 = vector.broadcast %3 : vector<1x256xf32> to vector<2x256xf32>
    %5 = arith.addf %2, %4 : vector<2x256xf32>
    %cst_5 = arith.constant 0.000000e+00 : f32
    %6 = vector.broadcast %cst_5 : f32 to vector<2x256xf32>
    %7 = arith.cmpf ogt, %5, %6 : vector<2x256xf32>
    %cst_6 = arith.constant 0.000000e+00 : f32
    %8 = vector.broadcast %cst_6 : f32 to vector<2x256xf32>
    %9 = arith.minimumf %5, %8 : vector<2x256xf32>
    %10 = math.exp %9 : vector<2x256xf32>
    %cst_7 = arith.constant 1.000000e+00 : f32
    %11 = vector.broadcast %cst_7 : f32 to vector<2x256xf32>
    %12 = arith.subf %10, %11 : vector<2x256xf32>
    %13 = arith.select %7, %5, %12 : vector<2x256xi1>, vector<2x256xf32>
    %c0_8 = arith.constant 0 : index
    %c0_9 = arith.constant 0 : index
    %14 = vector.load %arg3[%c0_8, %c0_9] : memref<256x256xf32, #tpu.memory_space<vmem>>, vector<256x256xf32>
    %cst_10 = arith.constant dense<0.000000e+00> : vector<2x256xf32>
    %15 = tpu.matmul %13, %14, %cst_10 {dimension_numbers = #tpu.dot_dimension_numbers<[1], [0], [0], [1], [0, 0, 1, 1], [], []>} : vector<2x256xf32>, vector<256x256xf32>, vector<2x256xf32> -> vector<2x256xf32>
    %c0_11 = arith.constant 0 : index
    %c0_12 = arith.constant 0 : index
    %16 = vector.load %arg4[%c0_11, %c0_12] : memref<1x256xf32, #tpu.memory_space<vmem>>, vector<1x256xf32>
    %17 = vector.broadcast %16 : vector<1x256xf32> to vector<2x256xf32>
    %18 = arith.addf %15, %17 : vector<2x256xf32>
    %cst_13 = arith.constant 0.000000e+00 : f32
    %19 = vector.broadcast %cst_13 : f32 to vector<2x256xf32>
    %20 = arith.cmpf ogt, %18, %19 : vector<2x256xf32>
    %cst_14 = arith.constant 0.000000e+00 : f32
    %21 = vector.broadcast %cst_14 : f32 to vector<2x256xf32>
    %22 = arith.minimumf %18, %21 : vector<2x256xf32>
    %23 = math.exp %22 : vector<2x256xf32>
    %cst_15 = arith.constant 1.000000e+00 : f32
    %24 = vector.broadcast %cst_15 : f32 to vector<2x256xf32>
    %25 = arith.subf %23, %24 : vector<2x256xf32>
    %26 = arith.select %20, %18, %25 : vector<2x256xi1>, vector<2x256xf32>
    %c0_16 = arith.constant 0 : index
    %c0_17 = arith.constant 0 : index
    %27 = vector.load %arg5[%c0_16, %c0_17] : memref<256x64xf32, #tpu.memory_space<vmem>>, vector<256x64xf32>
    %cst_18 = arith.constant dense<0.000000e+00> : vector<2x64xf32>
    %28 = tpu.matmul %26, %27, %cst_18 {dimension_numbers = #tpu.dot_dimension_numbers<[1], [0], [0], [1], [0, 0, 1, 1], [], []>} : vector<2x256xf32>, vector<256x64xf32>, vector<2x64xf32> -> vector<2x64xf32>
    %c0_19 = arith.constant 0 : index
    %c0_20 = arith.constant 0 : index
    %29 = vector.load %arg6[%c0_19, %c0_20] : memref<1x64xf32, #tpu.memory_space<vmem>>, vector<1x64xf32>
    %30 = vector.broadcast %29 : vector<1x64xf32> to vector<2x64xf32>
    %31 = arith.addf %28, %30 : vector<2x64xf32>
    %32 = math.tanh %31 : vector<2x64xf32>
    %c0_21 = arith.constant 0 : index
    %c0_22 = arith.constant 0 : index
    %33 = vector.load %arg7[%c0_21, %c0_22] : memref<64x128xf32, #tpu.memory_space<vmem>>, vector<64x128xf32>
    %cst_23 = arith.constant dense<0.000000e+00> : vector<2x128xf32>
    %34 = tpu.matmul %32, %33, %cst_23 {dimension_numbers = #tpu.dot_dimension_numbers<[1], [0], [0], [1], [0, 0, 1, 1], [], []>} : vector<2x64xf32>, vector<64x128xf32>, vector<2x128xf32> -> vector<2x128xf32>
    %c0_24 = arith.constant 0 : index
    %c0_25 = arith.constant 0 : index
    %35 = vector.load %arg8[%c0_24, %c0_25] : memref<1x128xf32, #tpu.memory_space<vmem>>, vector<1x128xf32>
    %36 = vector.broadcast %35 : vector<1x128xf32> to vector<2x128xf32>
    %37 = arith.addf %34, %36 : vector<2x128xf32>
    %38 = math.tanh %37 : vector<2x128xf32>
    %c0_26 = arith.constant 0 : index
    %c0_27 = arith.constant 0 : index
    %39 = vector.load %arg9[%c0_26, %c0_27] : memref<2x128xf32, #tpu.memory_space<vmem>>, vector<2x128xf32>
    tpu.vector_store %arg9[%c0_26, %c0_27], %38 {strides = array<i32>} : memref<2x128xf32, #tpu.memory_space<vmem>>, vector<2x128xf32>,
    return
  }
}

</mosaic_0001>

<llo_original>
// kernel: conv1d_extractor_forward.1
$region0: #{conv1d_extractor_forward.1}
  #allocation0 [shape = 'u32[]', space=smem, size = 0x4, offset = 0x4, fixed_abs, tag = 'smem constant byte address 0x4 - core index']
  #allocation1 [shape = 'u32[144,128]{1,0:T(1,128)}', space=vmem, size = 0x12000, scoped, tag = 'internal scratch']
  %s0 = inlined_call_operand.vmem [shape: f32[2,64], index: 0, kind: input, shape index: {}]
  %s1 = inlined_call_operand.vmem [shape: f32[64,256], index: 1, kind: input, shape index: {}]
  %s2 = inlined_call_operand.vmem [shape: f32[1,256], index: 2, kind: input, shape index: {}]
  %s3 = inlined_call_operand.hbm [shape: f32[256,256], index: 3, kind: input, shape index: {}]
  %s4 = inlined_call_operand.vmem [shape: f32[1,256], index: 4, kind: input, shape index: {}]
  %s5 = inlined_call_operand.vmem [shape: f32[256,64], index: 5, kind: input, shape index: {}]
  %s6 = inlined_call_operand.vmem [shape: f32[1,64], index: 6, kind: input, shape index: {}]
  %s7 = inlined_call_operand.vmem [shape: f32[64,128], index: 7, kind: input, shape index: {}]
  %s8 = inlined_call_operand.vmem [shape: f32[1,128], index: 8, kind: input, shape index: {}]
  %s9 = inlined_call_operand.vmem [shape: f32[2,128], index: 9, kind: output, shape index: {}]
  %s10 = sld [smem:[#allocation0]]
  $region50: #{conv1d_extractor_forward.1} parent=0
    _
  %s12 = ssub.s32 1, %s10
  %s13 = scalar_select 0, %s12, %s10
  $region1: #{conv1d_extractor_forward.1} parent=0
    #allocation2 [shape = 'u8[262144]{0}', space=vmem, size = 0x40000, scoped, tag = 'input window, operand 3, single buffered']
    #allocation3 [shape = 's32[1]{0}', space=sflag, size = 0x4, scoped, tag = 'scoped memory for conv1d_extractor_forward.1']
    %14 = vsyncpa [#allocation3], 0
    // Predicated region
    $region2: #{conv1d_extractor_forward.1} parent=1 // pred_check
      _
    $region3: #{conv1d_extractor_forward.1} parent=1 // pred_check_branch
      %16 = sbr.rel (0) target = $region5
    $region4: #{conv1d_extractor_forward.1} parent=1 // pred_region
      _
    $region5: #{conv1d_extractor_forward.1} parent=1 // pred_fallthru
      _
    // Predicated region
    $region6: #{conv1d_extractor_forward.1} parent=1 // pred_check
      _
    $region7: #{conv1d_extractor_forward.1} parent=1 // pred_check_branch
      %18 = sbr.rel (0) target = $region9
    $region8: #{conv1d_extractor_forward.1} parent=1 // pred_region
      _
    $region9: #{conv1d_extractor_forward.1} parent=1 // pred_fallthru
      _
    // Predicated region
    $region10: #{conv1d_extractor_forward.1} parent=1 // pred_check
      _
    $region11: #{conv1d_extractor_forward.1} parent=1 // pred_check_branch
      %20 = sbr.rel (0) target = $region13
    $region12: #{conv1d_extractor_forward.1} parent=1 // pred_region
      _
    $region13: #{conv1d_extractor_forward.1} parent=1 // pred_fallthru
      _
    // Predicated region
    $region14: #{conv1d_extractor_forward.1} parent=1 // pred_check
      _
    $region15: #{conv1d_extractor_forward.1} parent=1 // pred_check_branch
      %22 = sbr.rel (0) target = $region17
    $region16: #{conv1d_extractor_forward.1} parent=1 // pred_region
      %s24 = ssub.s32 8192, 8192
      %25 = vsyncadd [#allocation3], %s24
      %s26 = sshll.u32 [#allocation2], 4
      %s27 = int_to_ptr.vmem [resolvable:$true] %s26
      %32 = dma.hbm_to_vmem [thread:$0]  %s3, 8192, %s27, [#allocation3], 256, 256, 16
    $region17: #{conv1d_extractor_forward.1} parent=1 // pred_fallthru
      _
    // Predicated region
    $region18: #{conv1d_extractor_forward.1} parent=1 // pred_check
      _
    $region19: #{conv1d_extractor_forward.1} parent=1 // pred_check_branch
      %34 = sbr.rel (0) target = $region21
    $region20: #{conv1d_extractor_forward.1} parent=1 // pred_region
      _
    $region21: #{conv1d_extractor_forward.1} parent=1 // pred_fallthru
      _
    // Predicated region
    $region22: #{conv1d_extractor_forward.1} parent=1 // pred_check
      _
    $region23: #{conv1d_extractor_forward.1} parent=1 // pred_check_branch
      %36 = sbr.rel (0) target = $region25
    $region24: #{conv1d_extractor_forward.1} parent=1 // pred_region
      _
    $region25: #{conv1d_extractor_forward.1} parent=1 // pred_fallthru
      _
    // Predicated region
    $region26: #{conv1d_extractor_forward.1} parent=1 // pred_check
      _
    $region27: #{conv1d_extractor_forward.1} parent=1 // pred_check_branch
      %38 = sbr.rel (0) target = $region29
    $region28: #{conv1d_extractor_forward.1} parent=1 // pred_region
      _
    $region29: #{conv1d_extractor_forward.1} parent=1 // pred_fallthru
      _
    // Predicated region
    $region30: #{conv1d_extractor_forward.1} parent=1 // pred_check
      _
    $region31: #{conv1d_extractor_forward.1} parent=1 // pred_check_branch
      %40 = sbr.rel (0) target = $region33
    $region32: #{conv1d_extractor_forward.1} parent=1 // pred_region
      _
    $region33: #{conv1d_extractor_forward.1} parent=1 // pred_fallthru
      _
    // Predicated region
    $region34: #{conv1d_extractor_forward.1} parent=1 // pred_check
      _
    $region35: #{conv1d_extractor_forward.1} parent=1 // pred_check_branch
      %42 = sbr.rel (0) target = $region37
    $region36: #{conv1d_extractor_forward.1} parent=1 // pred_region
      _
    $region37: #{conv1d_extractor_forward.1} parent=1 // pred_fallthru
      _
    // Predicated region
    $region38: #{conv1d_extractor_forward.1} parent=1 // pred_check
      _
    $region39: #{conv1d_extractor_forward.1} parent=1 // pred_check_branch
      %44 = sbr.rel (0) target = $region41
    $region40: #{conv1d_extractor_forward.1} parent=1 // pred_region
      %45 = dma.done [#allocation3], 8192
    $region41: #{conv1d_extractor_forward.1} parent=1 // pred_fallthru
      _
    %v46 = vld [vmem:[%s0] sm:$0x3]
    %v47 = vld [vmem:[%s1] sm:$0xff]
    %v48 = vld [vmem:[%s1 + $0x8] sm:$0xff]
    %v49 = vld [vmem:[%s1 + $0x10] sm:$0xff]
    %v50 = vld [vmem:[%s1 + $0x18] sm:$0xff]
    %v51 = vld [vmem:[%s1 + $0x20] sm:$0xff]
    %v52 = vld [vmem:[%s1 + $0x28] sm:$0xff]
    %v53 = vld [vmem:[%s1 + $0x30] sm:$0xff]
    %v54 = vld [vmem:[%s1 + $0x38] sm:$0xff]
    %v55 = vld [vmem:[%s1 + $0x40] sm:$0xff]
    %v56 = vld [vmem:[%s1 + $0x48] sm:$0xff]
    %v57 = vld [vmem:[%s1 + $0x50] sm:$0xff]
    %v58 = vld [vmem:[%s1 + $0x58] sm:$0xff]
    %v59 = vld [vmem:[%s1 + $0x60] sm:$0xff]
    %v60 = vld [vmem:[%s1 + $0x68] sm:$0xff]
    %v61 = vld [vmem:[%s1 + $0x70] sm:$0xff]
    %v62 = vld [vmem:[%s1 + $0x78] sm:$0xff]
    %v63 = vld [vmem:[%s2] sm:$0x3]
    %v65 = vlaneseq
    %v66 = vshrl.u32 %v65, 7
    %v67 = vsub.s32 0, %v66
    %v68 = vrot.slane %v63, %v67
    %v69 = vlaneseq
    %v70 = vshrl.u32 %v69, 7
    %v71 = vsub.s32 1, %v70
    %v72 = vrot.slane %v63, %v71
    %vm75 = vcmask 523264
    %v77 = vsel %vm75, %v46, 0
    %79 = vmatprep.subr.mxu0 0.0
    %80 = vmatpush1.msra.mxu0 0.0
    %81 = vmatprep.subr.mxu0 0.0
    %82 = vmatpush1.msra.mxu0 0.0
    %83 = vmatprep.subr.mxu0 0.0
    %84 = vmatpush1.msra.mxu0 0.0
    %85 = vmatprep.subr.mxu0 0.0
    %86 = vmatpush1.msra.mxu0 0.0
    %87 = vmatprep.subr.mxu0 0.0
    %88 = vmatpush1.msra.mxu0 0.0
    %89 = vmatprep.subr.mxu0 0.0
    %90 = vmatpush1.msra.mxu0 0.0
    %91 = vmatprep.subr.mxu0 0.0
    %92 = vmatpush1.msra.mxu0 0.0
    %93 = vmatprep.subr.mxu0 0.0
    %94 = vmatpush1.msra.mxu0 0.0
    %95 = vmatprep.subr.mxu0 %v62
    %96 = vmatpush1.msra.mxu0 %v61
    %97 = vmatprep.subr.mxu0 %v60
    %98 = vmatpush1.msra.mxu0 %v59
    %99 = vmatprep.subr.mxu0 %v58
    %100 = vmatpush1.msra.mxu0 %v57
    %101 = vmatprep.subr.mxu0 %v56
    %102 = vmatpush1.msra.mxu0 %v55
    %103 = vmatprep.subr.mxu0 %v54
    %104 = vmatpush1.msra.mxu0 %v53
    %105 = vmatprep.subr.mxu0 %v52
    %106 = vmatpush1.msra.mxu0 %v51
    %107 = vmatprep.subr.mxu0 %v50
    %108 = vmatpush1.msra.mxu0 %v49
    %109 = vmatprep.subr.mxu0 %v48
    %110 = vmatpush1.msra.mxu0 %v47
    %111 = vmatprep.subr.mxu0 0.0
    %112 = vmatpush2.msra.mxu0 0.0
    %113 = vmatprep.subr.mxu0 0.0
    %114 = vmatpush2.msra.mxu0 0.0
    %115 = vmatprep.subr.mxu0 0.0
    %116 = vmatpush2.msra.mxu0 0.0
    %117 = vmatprep.subr.mxu0 0.0
    %118 = vmatpush2.msra.mxu0 0.0
    %119 = vmatprep.subr.mxu0 0.0
    %120 = vmatpush2.msra.mxu0 0.0
    %121 = vmatprep.subr.mxu0 0.0
    %122 = vmatpush2.msra.mxu0 0.0
    %123 = vmatprep.subr.mxu0 0.0
    %124 = vmatpush2.msra.mxu0 0.0
    %125 = vmatprep.subr.mxu0 0.0
    %126 = vmatpush2.msra.mxu0 0.0
    %127 = vmatprep.subr.mxu0 0.0
    %128 = vmatpush2.msra.mxu0 0.0
    %129 = vmatprep.subr.mxu0 0.0
    %130 = vmatpush2.msra.mxu0 0.0
    %131 = vmatprep.subr.mxu0 0.0
    %132 = vmatpush2.msra.mxu0 0.0
    %133 = vmatprep.subr.mxu0 0.0
    %134 = vmatpush2.msra.mxu0 0.0
    %135 = vmatprep.subr.mxu0 0.0
    %136 = vmatpush2.msra.mxu0 0.0
    %137 = vmatprep.subr.mxu0 0.0
    %138 = vmatpush2.msra.mxu0 0.0
    %139 = vmatprep.subr.mxu0 0.0
    %140 = vmatpush2.msra.mxu0 0.0
    %141 = vmatprep.subr.mxu0 0.0
    %142 = vmatpush2.msra.mxu0 0.0
    %143 = vmatprep.mubr.f32.mxu0 0.0
    %144 = vmatmul.mubr.f32.gmra.mxu0 %v77
    %v145 = vpop.f32.mrf.mxu0
    %v146 = vadd.f32 %v68, %v145
    %v147 = vpop.f32.mrf.mxu0
    %v148 = vadd.f32 %v72, %v147
    %149 = vdwg.mxu0
    %vm150 = vcmp.gt.f32.partialorder %v146, 0.0
    %vm151 = vcmp.gt.f32.partialorder %v148, 0.0
    %v152 = vmin.f32 %v146, 0.0
    %v153 = vmin.f32 %v148, 0.0
    %v154 = vmul.f32 %v152, 1.442695
    %v155 = vpow.pop %v154
    %v156 = vmul.f32 %v153, 1.442695
    %v157 = vpow.pop %v156
    %v158 = vsub.f32 %v155, 1.0
    %v159 = vsub.f32 %v157, 1.0
    %v160 = vsel %vm150, %v146, %v158
    %v161 = vsel %vm151, %v148, %v159
    %v162 = vld [vmem:[#allocation2] sm:$0xff]
    %v163 = vld [vmem:[#allocation2 + $0x8] sm:$0xff]
    %v164 = vld [vmem:[#allocation2 + $0x10] sm:$0xff]
    %v165 = vld [vmem:[#allocation2 + $0x18] sm:$0xff]
    %v166 = vld [vmem:[#allocation2 + $0x20] sm:$0xff]
    %v167 = vld [vmem:[#allocation2 + $0x28] sm:$0xff]
    %v168 = vld [vmem:[#allocation2 + $0x30] sm:$0xff]
    %v169 = vld [vmem:[#allocation2 + $0x38] sm:$0xff]
    %v170 = vld [vmem:[#allocation2 + $0x40] sm:$0xff]
    %v171 = vld [vmem:[#allocation2 + $0x48] sm:$0xff]
    %v172 = vld [vmem:[#allocation2 + $0x50] sm:$0xff]
    %v173 = vld [vmem:[#allocation2 + $0x58] sm:$0xff]
    %v174 = vld [vmem:[#allocation2 + $0x60] sm:$0xff]
    %v175 = vld [vmem:[#allocation2 + $0x68] sm:$0xff]
    %v176 = vld [vmem:[#allocation2 + $0x70] sm:$0xff]
    %v177 = vld [vmem:[#allocation2 + $0x78] sm:$0xff]
    %v178 = vld [vmem:[#allocation2 + $0x80] sm:$0xff]
    %v179 = vld [vmem:[#allocation2 + $0x88] sm:$0xff]
    %v180 = vld [vmem:[#allocation2 + $0x90] sm:$0xff]
    %v181 = vld [vmem:[#allocation2 + $0x98] sm:$0xff]
    %v182 = vld [vmem:[#allocation2 + $0xa0] sm:$0xff]
    %v183 = vld [vmem:[#allocation2 + $0xa8] sm:$0xff]
    %v184 = vld [vmem:[#allocation2 + $0xb0] sm:$0xff]
    %v185 = vld [vmem:[#allocation2 + $0xb8] sm:$0xff]
    %v186 = vld [vmem:[#allocation2 + $0xc0] sm:$0xff]
    %v187 = vld [vmem:[#allocation2 + $0xc8] sm:$0xff]
    %v188 = vld [vmem:[#allocation2 + $0xd0] sm:$0xff]
    %v189 = vld [vmem:[#allocation2 + $0xd8] sm:$0xff]
    %v190 = vld [vmem:[#allocation2 + $0xe0] sm:$0xff]
    %v191 = vld [vmem:[#allocation2 + $0xe8] sm:$0xff]
    %v192 = vld [vmem:[#allocation2 + $0xf0] sm:$0xff]
    %v193 = vld [vmem:[#allocation2 + $0xf8] sm:$0xff]
    %v194 = vld [vmem:[#allocation2 + $0x100] sm:$0xff]
    %v195 = vld [vmem:[#allocation2 + $0x108] sm:$0xff]
    %v196 = vld [vmem:[#allocation2 + $0x110] sm:$0xff]
    %v197 = vld [vmem:[#allocation2 + $0x118] sm:$0xff]
    %v198 = vld [vmem:[#allocation2 + $0x120] sm:$0xff]
    %v199 = vld [vmem:[#allocation2 + $0x128] sm:$0xff]
    %v200 = vld [vmem:[#allocation2 + $0x130] sm:$0xff]
    %v201 = vld [vmem:[#allocation2 + $0x138] sm:$0xff]
    %v202 = vld [vmem:[#allocation2 + $0x140] sm:$0xff]
    %v203 = vld [vmem:[#allocation2 + $0x148] sm:$0xff]
    %v204 = vld [vmem:[#allocation2 + $0x150] sm:$0xff]
    %v205 = vld [vmem:[#allocation2 + $0x158] sm:$0xff]
    %v206 = vld [vmem:[#allocation2 + $0x160] sm:$0xff]
    %v207 = vld [vmem:[#allocation2 + $0x168] sm:$0xff]
    %v208 = vld [vmem:[#allocation2 + $0x170] sm:$0xff]
    %v209 = vld [vmem:[#allocation2 + $0x178] sm:$0xff]
    %v210 = vld [vmem:[#allocation2 + $0x180] sm:$0xff]
    %v211 = vld [vmem:[#allocation2 + $0x188] sm:$0xff]
    %v212 = vld [vmem:[#allocation2 + $0x190] sm:$0xff]
    %v213 = vld [vmem:[#allocation2 + $0x198] sm:$0xff]
    %v214 = vld [vmem:[#allocation2 + $0x1a0] sm:$0xff]
    %v215 = vld [vmem:[#allocation2 + $0x1a8] sm:$0xff]
    %v216 = vld [vmem:[#allocation2 + $0x1b0] sm:$0xff]
    %v217 = vld [vmem:[#allocation2 + $0x1b8] sm:$0xff]
    %v218 = vld [vmem:[#allocation2 + $0x1c0] sm:$0xff]
    %v219 = vld [vmem:[#allocation2 + $0x1c8] sm:$0xff]
    %v220 = vld [vmem:[#allocation2 + $0x1d0] sm:$0xff]
    %v221 = vld [vmem:[#allocation2 + $0x1d8] sm:$0xff]
    %v222 = vld [vmem:[#allocation2 + $0x1e0] sm:$0xff]
    %v223 = vld [vmem:[#allocation2 + $0x1e8] sm:$0xff]
    %v224 = vld [vmem:[#allocation2 + $0x1f0] sm:$0xff]
    %v225 = vld [vmem:[#allocation2 + $0x1f8] sm:$0xff]
    %v226 = vld [vmem:[%s4] sm:$0x3]
    %v228 = vlaneseq
    %v229 = vshrl.u32 %v228, 7
    %v230 = vsub.s32 0, %v229
    %v231 = vrot.slane %v226, %v230
    %v232 = vlaneseq
    %v233 = vshrl.u32 %v232, 7
    %v234 = vsub.s32 1, %v233
    %v235 = vrot.slane %v226, %v234
    %238 = vmatprep.subr.mxu0 %v193
    %239 = vmatpush1.msra.mxu0 %v192
    %240 = vmatprep.subr.mxu0 %v191
    %241 = vmatpush1.msra.mxu0 %v190
    %242 = vmatprep.subr.mxu0 %v189
    %243 = vmatpush1.msra.mxu0 %v188
    %244 = vmatprep.subr.mxu0 %v187
    %245 = vmatpush1.msra.mxu0 %v186
    %246 = vmatprep.subr.mxu0 %v185
    %247 = vmatpush1.msra.mxu0 %v184
    %248 = vmatprep.subr.mxu0 %v183
    %249 = vmatpush1.msra.mxu0 %v182
    %250 = vmatprep.subr.mxu0 %v181
    %251 = vmatpush1.msra.mxu0 %v180
    %252 = vmatprep.subr.mxu0 %v179
    %253 = vmatpush1.msra.mxu0 %v178
    %254 = vmatprep.subr.mxu0 %v177
    %255 = vmatpush1.msra.mxu0 %v176
    %256 = vmatprep.subr.mxu0 %v175
    %257 = vmatpush1.msra.mxu0 %v174
    %258 = vmatprep.subr.mxu0 %v173
    %259 = vmatpush1.msra.mxu0 %v172
    %260 = vmatprep.subr.mxu0 %v171
    %261 = vmatpush1.msra.mxu0 %v170
    %262 = vmatprep.subr.mxu0 %v169
    %263 = vmatpush1.msra.mxu0 %v168
    %264 = vmatprep.subr.mxu0 %v167
    %265 = vmatpush1.msra.mxu0 %v166
    %266 = vmatprep.subr.mxu0 %v165
    %267 = vmatpush1.msra.mxu0 %v164
    %268 = vmatprep.subr.mxu0 %v163
    %269 = vmatpush1.msra.mxu0 %v162
    %270 = vmatprep.subr.mxu0 %v225
    %271 = vmatpush2.msra.mxu0 %v224
    %272 = vmatprep.subr.mxu0 %v223
    %273 = vmatpush2.msra.mxu0 %v222
    %274 = vmatprep.subr.mxu0 %v221
    %275 = vmatpush2.msra.mxu0 %v220
    %276 = vmatprep.subr.mxu0 %v219
    %277 = vmatpush2.msra.mxu0 %v218
    %278 = vmatprep.subr.mxu0 %v217
    %279 = vmatpush2.msra.mxu0 %v216
    %280 = vmatprep.subr.mxu0 %v215
    %281 = vmatpush2.msra.mxu0 %v214
    %282 = vmatprep.subr.mxu0 %v213
    %283 = vmatpush2.msra.mxu0 %v212
    %284 = vmatprep.subr.mxu0 %v211
    %285 = vmatpush2.msra.mxu0 %v210
    %286 = vmatprep.subr.mxu0 %v209
    %287 = vmatpush2.msra.mxu0 %v208
    %288 = vmatprep.subr.mxu0 %v207
    %289 = vmatpush2.msra.mxu0 %v206
    %290 = vmatprep.subr.mxu0 %v205
    %291 = vmatpush2.msra.mxu0 %v204
    %292 = vmatprep.subr.mxu0 %v203
    %293 = vmatpush2.msra.mxu0 %v202
    %294 = vmatprep.subr.mxu0 %v201
    %295 = vmatpush2.msra.mxu0 %v200
    %296 = vmatprep.subr.mxu0 %v199
    %297 = vmatpush2.msra.mxu0 %v198
    %298 = vmatprep.subr.mxu0 %v197
    %299 = vmatpush2.msra.mxu0 %v196
    %300 = vmatprep.subr.mxu0 %v195
    %301 = vmatpush2.msra.mxu0 %v194
    %302 = vmatprep.mubr.f32.mxu0 %v161
    %303 = vmatmul.mubr.f32.gmra.mxu0 %v160
    %v304 = vpop.f32.mrf.mxu0
    %v305 = vadd.f32 %v231, %v304
    %v306 = vpop.f32.mrf.mxu0
    %v307 = vadd.f32 %v235, %v306
    %308 = vdwg.mxu0
    %vm309 = vcmp.gt.f32.partialorder %v305, 0.0
    %vm310 = vcmp.gt.f32.partialorder %v307, 0.0
    %v311 = vmin.f32 %v305, 0.0
    %v312 = vmin.f32 %v307, 0.0
    %v313 = vmul.f32 %v311, 1.442695
    %v314 = vpow.pop %v313
    %v315 = vmul.f32 %v312, 1.442695
    %v316 = vpow.pop %v315
    %v317 = vsub.f32 %v314, 1.0
    %v318 = vsub.f32 %v316, 1.0
    %v319 = vsel %vm309, %v305, %v317
    %v320 = vsel %vm310, %v307, %v318
    %v321 = vld [vmem:[%s5] sm:$0xff]
    %v322 = vld [vmem:[%s5 + $0x8] sm:$0xff]
    %v323 = vld [vmem:[%s5 + $0x10] sm:$0xff]
    %v324 = vld [vmem:[%s5 + $0x18] sm:$0xff]
    %v325 = vld [vmem:[%s5 + $0x20] sm:$0xff]
    %v326 = vld [vmem:[%s5 + $0x28] sm:$0xff]
    %v327 = vld [vmem:[%s5 + $0x30] sm:$0xff]
    %v328 = vld [vmem:[%s5 + $0x38] sm:$0xff]
    %v329 = vld [vmem:[%s5 + $0x40] sm:$0xff]
    %v330 = vld [vmem:[%s5 + $0x48] sm:$0xff]
    %v331 = vld [vmem:[%s5 + $0x50] sm:$0xff]
    %v332 = vld [vmem:[%s5 + $0x58] sm:$0xff]
    %v333 = vld [vmem:[%s5 + $0x60] sm:$0xff]
    %v334 = vld [vmem:[%s5 + $0x68] sm:$0xff]
    %v335 = vld [vmem:[%s5 + $0x70] sm:$0xff]
    %v336 = vld [vmem:[%s5 + $0x78] sm:$0xff]
    %v337 = vld [vmem:[%s5 + $0x80] sm:$0xff]
    %v338 = vld [vmem:[%s5 + $0x88] sm:$0xff]
    %v339 = vld [vmem:[%s5 + $0x90] sm:$0xff]
    %v340 = vld [vmem:[%s5 + $0x98] sm:$0xff]
    %v341 = vld [vmem:[%s5 + $0xa0] sm:$0xff]
    %v342 = vld [vmem:[%s5 + $0xa8] sm:$0xff]
    %v343 = vld [vmem:[%s5 + $0xb0] sm:$0xff]
    %v344 = vld [vmem:[%s5 + $0xb8] sm:$0xff]
    %v345 = vld [vmem:[%s5 + $0xc0] sm:$0xff]
    %v346 = vld [vmem:[%s5 + $0xc8] sm:$0xff]
    %v347 = vld [vmem:[%s5 + $0xd0] sm:$0xff]
    %v348 = vld [vmem:[%s5 + $0xd8] sm:$0xff]
    %v349 = vld [vmem:[%s5 + $0xe0] sm:$0xff]
    %v350 = vld [vmem:[%s5 + $0xe8] sm:$0xff]
    %v351 = vld [vmem:[%s5 + $0xf0] sm:$0xff]
    %v352 = vld [vmem:[%s5 + $0xf8] sm:$0xff]
    %v353 = vld [vmem:[%s6] sm:$0x1]
    %v355 = vlaneseq
    %v356 = vshrl.u32 %v355, 7
    %v357 = vsub.s32 0, %v356
    %v358 = vrot.slane %v353, %v357
    %360 = vmatprep.subr.mxu0 0.0
    %361 = vmatpush1.msra.mxu0 %v336
    %362 = vmatprep.subr.mxu0 0.0
    %363 = vmatpush1.msra.mxu0 %v335
    %364 = vmatprep.subr.mxu0 0.0
    %365 = vmatpush1.msra.mxu0 %v334
    %366 = vmatprep.subr.mxu0 0.0
    %367 = vmatpush1.msra.mxu0 %v333
    %368 = vmatprep.subr.mxu0 0.0
    %369 = vmatpush1.msra.mxu0 %v332
    %370 = vmatprep.subr.mxu0 0.0
    %371 = vmatpush1.msra.mxu0 %v331
    %372 = vmatprep.subr.mxu0 0.0
    %373 = vmatpush1.msra.mxu0 %v330
    %374 = vmatprep.subr.mxu0 0.0
    %375 = vmatpush1.msra.mxu0 %v329
    %376 = vmatprep.subr.mxu0 0.0
    %377 = vmatpush1.msra.mxu0 %v328
    %378 = vmatprep.subr.mxu0 0.0
    %379 = vmatpush1.msra.mxu0 %v327
    %380 = vmatprep.subr.mxu0 0.0
    %381 = vmatpush1.msra.mxu0 %v326
    %382 = vmatprep.subr.mxu0 0.0
    %383 = vmatpush1.msra.mxu0 %v325
    %384 = vmatprep.subr.mxu0 0.0
    %385 = vmatpush1.msra.mxu0 %v324
    %386 = vmatprep.subr.mxu0 0.0
    %387 = vmatpush1.msra.mxu0 %v323
    %388 = vmatprep.subr.mxu0 0.0
    %389 = vmatpush1.msra.mxu0 %v322
    %390 = vmatprep.subr.mxu0 0.0
    %391 = vmatpush1.msra.mxu0 %v321
    %392 = vmatprep.subr.mxu0 0.0
    %393 = vmatpush2.msra.mxu0 %v352
    %394 = vmatprep.subr.mxu0 0.0
    %395 = vmatpush2.msra.mxu0 %v351
    %396 = vmatprep.subr.mxu0 0.0
    %397 = vmatpush2.msra.mxu0 %v350
    %398 = vmatprep.subr.mxu0 0.0
    %399 = vmatpush2.msra.mxu0 %v349
    %400 = vmatprep.subr.mxu0 0.0
    %401 = vmatpush2.msra.mxu0 %v348
    %402 = vmatprep.subr.mxu0 0.0
    %403 = vmatpush2.msra.mxu0 %v347
    %404 = vmatprep.subr.mxu0 0.0
    %405 = vmatpush2.msra.mxu0 %v346
    %406 = vmatprep.subr.mxu0 0.0
    %407 = vmatpush2.msra.mxu0 %v345
    %408 = vmatprep.subr.mxu0 0.0
    %409 = vmatpush2.msra.mxu0 %v344
    %410 = vmatprep.subr.mxu0 0.0
    %411 = vmatpush2.msra.mxu0 %v343
    %412 = vmatprep.subr.mxu0 0.0
    %413 = vmatpush2.msra.mxu0 %v342
    %414 = vmatprep.subr.mxu0 0.0
    %415 = vmatpush2.msra.mxu0 %v341
    %416 = vmatprep.subr.mxu0 0.0
    %417 = vmatpush2.msra.mxu0 %v340
    %418 = vmatprep.subr.mxu0 0.0
    %419 = vmatpush2.msra.mxu0 %v339
    %420 = vmatprep.subr.mxu0 0.0
    %421 = vmatpush2.msra.mxu0 %v338
    %422 = vmatprep.subr.mxu0 0.0
    %423 = vmatpush2.msra.mxu0 %v337
    %424 = vmatprep.mubr.f32.mxu0 %v320
    %425 = vmatmul.mubr.f32.gmra.mxu0 %v319
    %v426 = vpop.f32.mrf.mxu0
    %v427 = vadd.f32 %v358, %v426
    %v428 = vpop.f32.mrf.mxu0
    %429 = vdwg.mxu0
    %v430 = vtanh.pop %v427
    %v431 = vld [vmem:[%s7] sm:$0xff]
    %v432 = vld [vmem:[%s7 + $0x8] sm:$0xff]
    %v433 = vld [vmem:[%s7 + $0x10] sm:$0xff]
    %v434 = vld [vmem:[%s7 + $0x18] sm:$0xff]
    %v435 = vld [vmem:[%s7 + $0x20] sm:$0xff]
    %v436 = vld [vmem:[%s7 + $0x28] sm:$0xff]
    %v437 = vld [vmem:[%s7 + $0x30] sm:$0xff]
    %v438 = vld [vmem:[%s7 + $0x38] sm:$0xff]
    %v439 = vld [vmem:[%s8] sm:$0x1]
    %v441 = vlaneseq
    %v442 = vshrl.u32 %v441, 7
    %v443 = vsub.s32 0, %v442
    %v444 = vrot.slane %v439, %v443
    %v447 = vsel %vm75, %v430, 0
    %449 = vmatprep.subr.mxu0 0.0
    %450 = vmatpush1.msra.mxu0 0.0
    %451 = vmatprep.subr.mxu0 0.0
    %452 = vmatpush1.msra.mxu0 0.0
    %453 = vmatprep.subr.mxu0 0.0
    %454 = vmatpush1.msra.mxu0 0.0
    %455 = vmatprep.subr.mxu0 0.0
    %456 = vmatpush1.msra.mxu0 0.0
    %457 = vmatprep.subr.mxu0 0.0
    %458 = vmatpush1.msra.mxu0 0.0
    %459 = vmatprep.subr.mxu0 0.0
    %460 = vmatpush1.msra.mxu0 0.0
    %461 = vmatprep.subr.mxu0 0.0
    %462 = vmatpush1.msra.mxu0 0.0
    %463 = vmatprep.subr.mxu0 0.0
    %464 = vmatpush1.msra.mxu0 0.0
    %465 = vmatprep.subr.mxu0 0.0
    %466 = vmatpush1.msra.mxu0 %v438
    %467 = vmatprep.subr.mxu0 0.0
    %468 = vmatpush1.msra.mxu0 %v437
    %469 = vmatprep.subr.mxu0 0.0
    %470 = vmatpush1.msra.mxu0 %v436
    %471 = vmatprep.subr.mxu0 0.0
    %472 = vmatpush1.msra.mxu0 %v435
    %473 = vmatprep.subr.mxu0 0.0
    %474 = vmatpush1.msra.mxu0 %v434
    %475 = vmatprep.subr.mxu0 0.0
    %476 = vmatpush1.msra.mxu0 %v433
    %477 = vmatprep.subr.mxu0 0.0
    %478 = vmatpush1.msra.mxu0 %v432
    %479 = vmatprep.subr.mxu0 0.0
    %480 = vmatpush1.msra.mxu0 %v431
    %481 = vmatprep.subr.mxu0 0.0
    %482 = vmatpush2.msra.mxu0 0.0
    %483 = vmatprep.subr.mxu0 0.0
    %484 = vmatpush2.msra.mxu0 0.0
    %485 = vmatprep.subr.mxu0 0.0
    %486 = vmatpush2.msra.mxu0 0.0
    %487 = vmatprep.subr.mxu0 0.0
    %488 = vmatpush2.msra.mxu0 0.0
    %489 = vmatprep.subr.mxu0 0.0
    %490 = vmatpush2.msra.mxu0 0.0
    %491 = vmatprep.subr.mxu0 0.0
    %492 = vmatpush2.msra.mxu0 0.0
    %493 = vmatprep.subr.mxu0 0.0
    %494 = vmatpush2.msra.mxu0 0.0
    %495 = vmatprep.subr.mxu0 0.0
    %496 = vmatpush2.msra.mxu0 0.0
    %497 = vmatprep.subr.mxu0 0.0
    %498 = vmatpush2.msra.mxu0 0.0
    %499 = vmatprep.subr.mxu0 0.0
    %500 = vmatpush2.msra.mxu0 0.0
    %501 = vmatprep.subr.mxu0 0.0
    %502 = vmatpush2.msra.mxu0 0.0
    %503 = vmatprep.subr.mxu0 0.0
    %504 = vmatpush2.msra.mxu0 0.0
    %505 = vmatprep.subr.mxu0 0.0
    %506 = vmatpush2.msra.mxu0 0.0
    %507 = vmatprep.subr.mxu0 0.0
    %508 = vmatpush2.msra.mxu0 0.0
    %509 = vmatprep.subr.mxu0 0.0
    %510 = vmatpush2.msra.mxu0 0.0
    %511 = vmatprep.subr.mxu0 0.0
    %512 = vmatpush2.msra.mxu0 0.0
    %513 = vmatprep.mubr.f32.mxu0 0.0
    %514 = vmatmul.mubr.f32.gmra.mxu0 %v447
    %v515 = vpop.f32.mrf.mxu0
    %v516 = vadd.f32 %v444, %v515
    %v517 = vpop.f32.mrf.mxu0
    %518 = vdwg.mxu0
    %v519 = vtanh.pop %v516
    %520 = vst [vmem:[%s9] sm:$0x3] %v519
    // Predicated region
    $region42: #{conv1d_extractor_forward.1} parent=1 // pred_check
      _
    $region43: #{conv1d_extractor_forward.1} parent=1 // pred_check_branch
      %522 = sbr.rel (0) target = $region45
    $region44: #{conv1d_extractor_forward.1} parent=1 // pred_region
      _
    $region45: #{conv1d_extractor_forward.1} parent=1 // pred_fallthru
      _
    // Predicated region
    $region46: #{conv1d_extractor_forward.1} parent=1 // pred_check
      _
    $region47: #{conv1d_extractor_forward.1} parent=1 // pred_check_branch
      %524 = sbr.rel (0) target = $region49
    $region48: #{conv1d_extractor_forward.1} parent=1 // pred_region
      _
    $region49: #{conv1d_extractor_forward.1} parent=1 // pred_fallthru
      _
    %525 = vsyncpa [#allocation3], 1

</llo_original>
